<compile_context>
chip_gen: v7x
topology: tpu7x:2x2x1
jax: 0.10.0
libtpu: 0.0.40
codegen_flags: <defaults>
</compile_context>

<pallas_src>
import functools

import numpy as np

import jax
import jax.numpy as jnp
from jax.experimental import pallas as pl
from jax.experimental.pallas import tpu as pltpu

_EPS = 1e-5


def _resblock_kernel(x_ref, m_ref, w1_ref, g1_ref, b1_ref, w2_ref, g2_ref,
                     b2_ref, out_ref, *, w):
    # x_ref   : (C, N)      N = B*H*W on the lane axis (channel-major slab)
    # m_ref   : (9*C, N)    0/1 zero-padding masks, tap-major, reused by both convs
    # w{1,2}  : (Cout, 9*C) 3x3 taps flattened as (ky*3+kx)*C + ci
    # g/b     : (Cout, 1)   BatchNorm affine params
    # out_ref : (Cout, N)
    cin, n = x_ref.shape
    inv_n = 1.0 / n

    x = x_ref[...]          # f32
    mask = m_ref[...]       # f32 0/1

    # Static lane shifts: tap (dy,dx) at output lane i needs x[:, i + dy*W + dx].
    offs = tuple((dy, dx) for dy in (-1, 0, 1) for dx in (-1, 0, 1))
    shifts = tuple((-(dy * w + dx)) % n for dy, dx in offs)

    def conv3x3(act, wmat):
        # Circular rolls put every wrap-around / cross-image lane exactly on a
        # masked (zero-padded) position; one multiply applies all 9 border
        # masks; one MXU dot does the whole K = 9*C contraction.
        taps = jnp.concatenate(
            [act if s == 0 else pltpu.roll(act, shift=s, axis=1)
             for s in shifts], axis=0)                    # (9*C, N)
        taps = taps * mask
        return jnp.dot(wmat, taps, preferred_element_type=jnp.float32)

    def bn(acc, g, b):
        # Training-mode BatchNorm (batch stats, biased variance), two-pass var,
        # folded into a single per-channel FMA.
        mean = jnp.sum(acc, axis=1, keepdims=True) * inv_n
        ctr = acc - mean
        var = jnp.sum(ctr * ctr, axis=1, keepdims=True) * inv_n
        scale = g * jax.lax.rsqrt(var + _EPS)
        return ctr * scale + b

    y = jnp.maximum(bn(conv3x3(x, w1_ref[...]), g1_ref[...], b1_ref[...]), 0.0)
    z = bn(conv3x3(y, w2_ref[...]), g2_ref[...], b2_ref[...]) + x  # residual
    out_ref[...] = jnp.maximum(z, 0.0).astype(out_ref.dtype)


def _tap_mask_slab(b, c, h, w):
    """(9*c, b*h*w) f32 0/1 zero-padding masks, computed on host (no XLA ops)."""
    hw = h * w
    pos = np.arange(b * hw, dtype=np.int64) % hw
    hh, ww = pos // w, pos % w
    rows = []
    for dy in (-1, 0, 1):
        for dx in (-1, 0, 1):
            m = ((hh + dy >= 0) & (hh + dy < h) & (ww + dx >= 0) & (ww + dx < w))
            rows.append(np.broadcast_to(m.astype(np.float32), (c, b * hw)))
    return jnp.asarray(np.concatenate(rows, axis=0))


def residual_block_forward(x_nchw, params):
    """x_nchw: (B, C, H, W); params = (w1, g1, b1, w2, g2, b2), conv weights HWIO."""
    w1, g1, b1, w2, g2, b2 = params
    B, C, H, W = x_nchw.shape
    Cout = w1.shape[-1]
    assert Cout == C, "identity residual requires Cin == Cout (downsample=None)"
    N = B * H * W

    # Channel-major, lane-dense layout (C, B*H*W).
    # TODO(synk): keep this channel-major layout end-to-end at the model level
    # so both adapter transposes around the kernel disappear entirely.
    xcf = jnp.transpose(x_nchw, (1, 0, 2, 3)).reshape(C, N).astype(jnp.float32)
    # HWIO (3,3,Ci,Co) -> (Co, 9*Ci), column index (ky*3+kx)*Ci + ci.
    w1m = jnp.transpose(w1, (3, 0, 1, 2)).reshape(Cout, 9 * C).astype(jnp.float32)
    w2m = jnp.transpose(w2, (3, 0, 1, 2)).reshape(Cout, 9 * Cout).astype(jnp.float32)
    g1c = g1.reshape(Cout, 1).astype(jnp.float32)
    b1c = b1.reshape(Cout, 1).astype(jnp.float32)
    g2c = g2.reshape(Cout, 1).astype(jnp.float32)
    b2c = b2.reshape(Cout, 1).astype(jnp.float32)
    mask = _tap_mask_slab(B, C, H, W)                           # (9*C, N)

    def full(shape):
        return pl.BlockSpec(shape, lambda i, _n=len(shape): (0,) * _n)

    # Advisory cost estimate so XLA schedules the tiny kernel's neighbours well.
    flops = 2 * (2 * Cout * 9 * C * N) + 16 * Cout * N
    bytes_accessed = 4 * (C * N + 9 * C * N + 18 * C * Cout + 4 * Cout + Cout * N)
    cost = pl.CostEstimate(flops=flops, transcendentals=2 * Cout,
                           bytes_accessed=bytes_accessed)

    # Batch-statistics BN couples every pixel of the batch, so at this tiny
    # size the whole block runs as one fused program (<0.5 MiB of VMEM).
    # TODO(synk): at production sizes (large B*H*W, C>=128) restructure into a
    # tiled grid -- spatial axis marked "parallel" for v7x's two TensorCores,
    # two-pass BN via sum/sumsq accumulators, and tiles sized for v7x's 64 MiB
    # VMEM with an explicit vmem_limit_bytes.
    out_cf = pl.pallas_call(
        functools.partial(_resblock_kernel, w=W),
        grid=(1,),
        in_specs=[full(xcf.shape), full(mask.shape), full(w1m.shape),
                  full(g1c.shape), full(b1c.shape), full(w2m.shape),
                  full(g2c.shape), full(b2c.shape)],
        out_specs=full((Cout, N)),
        out_shape=jax.ShapeDtypeStruct((Cout, N), jnp.float32),
        compiler_params=pltpu.CompilerParams(
            dimension_semantics=("arbitrary",)),
        cost_estimate=cost,
    )(xcf, mask, w1m, g1c, b1c, w2m, g2c, b2c)

    # One fused reshape+transpose back to the module's NCHW interface.
    return jnp.transpose(out_cf.reshape(Cout, B, H, W), (1, 0, 2, 3))


def residual_block_reference(x_nchw, params):
    """Pure-JAX reference (same semantics) for correctness checking."""
    w1, g1, b1, w2, g2, b2 = params

    def conv(x, w):  # x: NCHW, w: HWIO
        return jax.lax.conv_general_dilated(
            x, w, window_strides=(1, 1), padding=((1, 1), (1, 1)),
            dimension_numbers=("NCHW", "HWIO", "NCHW"))

    def bn(x, g, b):
        mean = jnp.mean(x, axis=(0, 2, 3), keepdims=True)
        var = jnp.mean((x - mean) ** 2, axis=(0, 2, 3), keepdims=True)
        return ((x - mean) * jax.lax.rsqrt(var + _EPS)
                * g.reshape(1, -1, 1, 1) + b.reshape(1, -1, 1, 1))

    out = jnp.maximum(bn(conv(x_nchw, w1), g1, b1), 0.0)
    out = bn(conv(out, w2), g2, b2)
    return jnp.maximum(out + x_nchw, 0.0)


if __name__ == "__main__":
    B, C, H, W = 2, 4, 16, 16   # in_channels == out_channels (downsample=None)

    key = jax.random.PRNGKey(0)
    kx, k1, k2, kg1, kb1, kg2, kb2 = jax.random.split(key, 7)

    x = jax.random.normal(kx, (B, C, H, W), jnp.float32)
    # conv weights generated directly in HWIO; PyTorch (OIHW) would be w.transpose(2,3,1,0)
    w1 = 0.1 * jax.random.normal(k1, (3, 3, C, C), jnp.float32)
    w2 = 0.1 * jax.random.normal(k2, (3, 3, C, C), jnp.float32)
    g1 = 1.0 + 0.05 * jax.random.normal(kg1, (C,), jnp.float32)
    b1 = 0.05 * jax.random.normal(kb1, (C,), jnp.float32)
    g2 = 1.0 + 0.05 * jax.random.normal(kg2, (C,), jnp.float32)
    b2 = 0.05 * jax.random.normal(kb2, (C,), jnp.float32)
    params = (w1, g1, b1, w2, g2, b2)

    out = residual_block_forward(x, params)
    out = jax.block_until_ready(out)

    ref = jax.block_until_ready(residual_block_reference(x, params))
    assert out.shape == (B, C, H, W)
    assert jnp.allclose(out, ref, rtol=1e-3, atol=1e-3), float(jnp.max(jnp.abs(out - ref)))

    print("KERNEL_OK")
</pallas_src>

<mosaic_0001>
module attributes {stable_mosaic.version = 11 : i64} {
  func.func @_resblock_kernel(%arg0: i32, %arg1: memref<4x512xf32, #tpu.memory_space<vmem>>, %arg2: memref<36x512xf32, #tpu.memory_space<vmem>>, %arg3: memref<4x36xf32, #tpu.memory_space<vmem>>, %arg4: memref<4x1xf32, #tpu.memory_space<vmem>>, %arg5: memref<4x1xf32, #tpu.memory_space<vmem>>, %arg6: memref<4x36xf32, #tpu.memory_space<vmem>>, %arg7: memref<4x1xf32, #tpu.memory_space<vmem>>, %arg8: memref<4x1xf32, #tpu.memory_space<vmem>>, %arg9: memref<4x512xf32, #tpu.memory_space<vmem>>) attributes {dimension_semantics = [#tpu.dimension_semantics<arbitrary>], iteration_bounds = array<i64: 1>, scalar_prefetch = 0 : i64, scratch_operands = 0 : i64, tpu.core_type = #tpu.core_type<tc>, window_params = [{pipeline_mode = #tpu.pipeline_mode<synchronous>, transform_indices = @transform_0, window_bounds = array<i64: 4, 512>}, {pipeline_mode = #tpu.pipeline_mode<synchronous>, transform_indices = @transform_1, window_bounds = array<i64: 36, 512>}, {pipeline_mode = #tpu.pipeline_mode<synchronous>, transform_indices = @transform_2, window_bounds = array<i64: 4, 36>}, {pipeline_mode = #tpu.pipeline_mode<synchronous>, transform_indices = @transform_3, window_bounds = array<i64: 4, 1>}, {pipeline_mode = #tpu.pipeline_mode<synchronous>, transform_indices = @transform_4, window_bounds = array<i64: 4, 1>}, {pipeline_mode = #tpu.pipeline_mode<synchronous>, transform_indices = @transform_5, window_bounds = array<i64: 4, 36>}, {pipeline_mode = #tpu.pipeline_mode<synchronous>, transform_indices = @transform_6, window_bounds = array<i64: 4, 1>}, {pipeline_mode = #tpu.pipeline_mode<synchronous>, transform_indices = @transform_7, window_bounds = array<i64: 4, 1>}, {pipeline_mode = #tpu.pipeline_mode<synchronous>, transform_indices = @transform_8, window_bounds = array<i64: 4, 512>}]} {
    %c0 = arith.constant 0 : index
    %c0_0 = arith.constant 0 : index
    %0 = vector.load %arg1[%c0, %c0_0] : memref<4x512xf32, #tpu.memory_space<vmem>>, vector<4x512xf32>
    %c0_1 = arith.constant 0 : index
    %c0_2 = arith.constant 0 : index
    %1 = vector.load %arg2[%c0_1, %c0_2] : memref<36x512xf32, #tpu.memory_space<vmem>>, vector<36x512xf32>
    %c0_3 = arith.constant 0 : index
    %c0_4 = arith.constant 0 : index
    %2 = vector.load %arg3[%c0_3, %c0_4] : memref<4x36xf32, #tpu.memory_space<vmem>>, vector<4x36xf32>
    %c17_i32 = arith.constant 17 : i32
    %3 = tpu.dynamic_rotate %0 by %c17_i32 dim 1 : vector<4x512xf32>, i32 -> vector<4x512xf32>
    %c16_i32 = arith.constant 16 : i32
    %4 = tpu.dynamic_rotate %0 by %c16_i32 dim 1 : vector<4x512xf32>, i32 -> vector<4x512xf32>
    %c15_i32 = arith.constant 15 : i32
    %5 = tpu.dynamic_rotate %0 by %c15_i32 dim 1 : vector<4x512xf32>, i32 -> vector<4x512xf32>
    %c1_i32 = arith.constant 1 : i32
    %6 = tpu.dynamic_rotate %0 by %c1_i32 dim 1 : vector<4x512xf32>, i32 -> vector<4x512xf32>
    %c511_i32 = arith.constant 511 : i32
    %7 = tpu.dynamic_rotate %0 by %c511_i32 dim 1 : vector<4x512xf32>, i32 -> vector<4x512xf32>
    %c497_i32 = arith.constant 497 : i32
    %8 = tpu.dynamic_rotate %0 by %c497_i32 dim 1 : vector<4x512xf32>, i32 -> vector<4x512xf32>
    %c496_i32 = arith.constant 496 : i32
    %9 = tpu.dynamic_rotate %0 by %c496_i32 dim 1 : vector<4x512xf32>, i32 -> vector<4x512xf32>
    %c495_i32 = arith.constant 495 : i32
    %10 = tpu.dynamic_rotate %0 by %c495_i32 dim 1 : vector<4x512xf32>, i32 -> vector<4x512xf32>
    %11 = tpu.concatenate %3, %4, %5, %6, %0, %7, %8, %9, %10 in 0 : vector<4x512xf32>, vector<4x512xf32>, vector<4x512xf32>, vector<4x512xf32>, vector<4x512xf32>, vector<4x512xf32>, vector<4x512xf32>, vector<4x512xf32>, vector<4x512xf32> -> vector<36x512xf32>
    %12 = arith.mulf %11, %1 : vector<36x512xf32>
    %cst = arith.constant dense<0.000000e+00> : vector<4x512xf32>
    %13 = tpu.matmul %2, %12, %cst {dimension_numbers = #tpu.dot_dimension_numbers<[1], [0], [0], [1], [0, 0, 1, 1], [], []>} : vector<4x36xf32>, vector<36x512xf32>, vector<4x512xf32> -> vector<4x512xf32>
    %c0_5 = arith.constant 0 : index
    %c0_6 = arith.constant 0 : index
    %14 = vector.load %arg4[%c0_5, %c0_6] : memref<4x1xf32, #tpu.memory_space<vmem>>, vector<4x1xf32>
    %c0_7 = arith.constant 0 : index
    %c0_8 = arith.constant 0 : index
    %15 = vector.load %arg5[%c0_7, %c0_8] : memref<4x1xf32, #tpu.memory_space<vmem>>, vector<4x1xf32>
    %cst_9 = arith.constant dense<0.000000e+00> : vector<4xf32>
    %16 = vector.multi_reduction <add>, %13, %cst_9 [1] : vector<4x512xf32> to vector<4xf32>
    %17 = vector.shape_cast %16 : vector<4xf32> to vector<4x1xf32>
    %cst_10 = arith.constant 0.001953125 : f32
    %18 = vector.broadcast %cst_10 : f32 to vector<4x1xf32>
    %19 = arith.mulf %17, %18 : vector<4x1xf32>
    %20 = vector.broadcast %19 : vector<4x1xf32> to vector<4x512xf32>
    %21 = arith.subf %13, %20 : vector<4x512xf32>
    %22 = arith.mulf %21, %21 : vector<4x512xf32>
    %cst_11 = arith.constant dense<0.000000e+00> : vector<4xf32>
    %23 = vector.multi_reduction <add>, %22, %cst_11 [1] : vector<4x512xf32> to vector<4xf32>
    %24 = vector.shape_cast %23 : vector<4xf32> to vector<4x1xf32>
    %cst_12 = arith.constant 0.001953125 : f32
    %25 = vector.broadcast %cst_12 : f32 to vector<4x1xf32>
    %26 = arith.mulf %24, %25 : vector<4x1xf32>
    %cst_13 = arith.constant 9.99999974E-6 : f32
    %27 = vector.broadcast %cst_13 : f32 to vector<4x1xf32>
    %28 = arith.addf %26, %27 : vector<4x1xf32>
    %29 = math.rsqrt %28 : vector<4x1xf32>
    %30 = arith.mulf %14, %29 : vector<4x1xf32>
    %31 = vector.broadcast %30 : vector<4x1xf32> to vector<4x512xf32>
    %32 = arith.mulf %21, %31 : vector<4x512xf32>
    %33 = vector.broadcast %15 : vector<4x1xf32> to vector<4x512xf32>
    %34 = arith.addf %32, %33 : vector<4x512xf32>
    %cst_14 = arith.constant 0.000000e+00 : f32
    %35 = vector.broadcast %cst_14 : f32 to vector<4x512xf32>
    %36 = arith.maximumf %34, %35 : vector<4x512xf32>
    %c0_15 = arith.constant 0 : index
    %c0_16 = arith.constant 0 : index
    %37 = vector.load %arg6[%c0_15, %c0_16] : memref<4x36xf32, #tpu.memory_space<vmem>>, vector<4x36xf32>
    %c17_i32_17 = arith.constant 17 : i32
    %38 = tpu.dynamic_rotate %36 by %c17_i32_17 dim 1 : vector<4x512xf32>, i32 -> vector<4x512xf32>
    %c16_i32_18 = arith.constant 16 : i32
    %39 = tpu.dynamic_rotate %36 by %c16_i32_18 dim 1 : vector<4x512xf32>, i32 -> vector<4x512xf32>
    %c15_i32_19 = arith.constant 15 : i32
    %40 = tpu.dynamic_rotate %36 by %c15_i32_19 dim 1 : vector<4x512xf32>, i32 -> vector<4x512xf32>
    %c1_i32_20 = arith.constant 1 : i32
    %41 = tpu.dynamic_rotate %36 by %c1_i32_20 dim 1 : vector<4x512xf32>, i32 -> vector<4x512xf32>
    %c511_i32_21 = arith.constant 511 : i32
    %42 = tpu.dynamic_rotate %36 by %c511_i32_21 dim 1 : vector<4x512xf32>, i32 -> vector<4x512xf32>
    %c497_i32_22 = arith.constant 497 : i32
    %43 = tpu.dynamic_rotate %36 by %c497_i32_22 dim 1 : vector<4x512xf32>, i32 -> vector<4x512xf32>
    %c496_i32_23 = arith.constant 496 : i32
    %44 = tpu.dynamic_rotate %36 by %c496_i32_23 dim 1 : vector<4x512xf32>, i32 -> vector<4x512xf32>
    %c495_i32_24 = arith.constant 495 : i32
    %45 = tpu.dynamic_rotate %36 by %c495_i32_24 dim 1 : vector<4x512xf32>, i32 -> vector<4x512xf32>
    %46 = tpu.concatenate %38, %39, %40, %41, %36, %42, %43, %44, %45 in 0 : vector<4x512xf32>, vector<4x512xf32>, vector<4x512xf32>, vector<4x512xf32>, vector<4x512xf32>, vector<4x512xf32>, vector<4x512xf32>, vector<4x512xf32>, vector<4x512xf32> -> vector<36x512xf32>
    %47 = arith.mulf %46, %1 : vector<36x512xf32>
    %cst_25 = arith.constant dense<0.000000e+00> : vector<4x512xf32>
    %48 = tpu.matmul %37, %47, %cst_25 {dimension_numbers = #tpu.dot_dimension_numbers<[1], [0], [0], [1], [0, 0, 1, 1], [], []>} : vector<4x36xf32>, vector<36x512xf32>, vector<4x512xf32> -> vector<4x512xf32>
    %c0_26 = arith.constant 0 : index
    %c0_27 = arith.constant 0 : index
    %49 = vector.load %arg7[%c0_26, %c0_27] : memref<4x1xf32, #tpu.memory_space<vmem>>, vector<4x1xf32>
    %c0_28 = arith.constant 0 : index
    %c0_29 = arith.constant 0 : index
    %50 = vector.load %arg8[%c0_28, %c0_29] : memref<4x1xf32, #tpu.memory_space<vmem>>, vector<4x1xf32>
    %cst_30 = arith.constant dense<0.000000e+00> : vector<4xf32>
    %51 = vector.multi_reduction <add>, %48, %cst_30 [1] : vector<4x512xf32> to vector<4xf32>
    %52 = vector.shape_cast %51 : vector<4xf32> to vector<4x1xf32>
    %cst_31 = arith.constant 0.001953125 : f32
    %53 = vector.broadcast %cst_31 : f32 to vector<4x1xf32>
    %54 = arith.mulf %52, %53 : vector<4x1xf32>
    %55 = vector.broadcast %54 : vector<4x1xf32> to vector<4x512xf32>
    %56 = arith.subf %48, %55 : vector<4x512xf32>
    %57 = arith.mulf %56, %56 : vector<4x512xf32>
    %cst_32 = arith.constant dense<0.000000e+00> : vector<4xf32>
    %58 = vector.multi_reduction <add>, %57, %cst_32 [1] : vector<4x512xf32> to vector<4xf32>
    %59 = vector.shape_cast %58 : vector<4xf32> to vector<4x1xf32>
    %cst_33 = arith.constant 0.001953125 : f32
    %60 = vector.broadcast %cst_33 : f32 to vector<4x1xf32>
    %61 = arith.mulf %59, %60 : vector<4x1xf32>
    %cst_34 = arith.constant 9.99999974E-6 : f32
    %62 = vector.broadcast %cst_34 : f32 to vector<4x1xf32>
    %63 = arith.addf %61, %62 : vector<4x1xf32>
    %64 = math.rsqrt %63 : vector<4x1xf32>
    %65 = arith.mulf %49, %64 : vector<4x1xf32>
    %66 = vector.broadcast %65 : vector<4x1xf32> to vector<4x512xf32>
    %67 = arith.mulf %56, %66 : vector<4x512xf32>
    %68 = vector.broadcast %50 : vector<4x1xf32> to vector<4x512xf32>
    %69 = arith.addf %67, %68 : vector<4x512xf32>
    %70 = arith.addf %69, %0 : vector<4x512xf32>
    %cst_35 = arith.constant 0.000000e+00 : f32
    %71 = vector.broadcast %cst_35 : f32 to vector<4x512xf32>
    %72 = arith.maximumf %70, %71 : vector<4x512xf32>
    %c0_36 = arith.constant 0 : index
    %c0_37 = arith.constant 0 : index
    %73 = vector.load %arg9[%c0_36, %c0_37] : memref<4x512xf32, #tpu.memory_space<vmem>>, vector<4x512xf32>
    tpu.vector_store %arg9[%c0_36, %c0_37], %72 {strides = array<i32>} : memref<4x512xf32, #tpu.memory_space<vmem>>, vector<4x512xf32>,
    return
  }
  func.func @transform_0(%arg0: i32) -> (i32, i32) {
    %c0_i32 = arith.constant 0 : i32
    %c0_i32_0 = arith.constant 0 : i32
    %c0_i32_1 = arith.constant 0 : i32
    return %c0_i32, %c0_i32_0 : i32, i32
  }
  func.func @transform_1(%arg0: i32) -> (i32, i32) {
    %c0_i32 = arith.constant 0 : i32
    %c0_i32_0 = arith.constant 0 : i32
    %c0_i32_1 = arith.constant 0 : i32
    return %c0_i32, %c0_i32_0 : i32, i32
  }
  func.func @transform_2(%arg0: i32) -> (i32, i32) {
    %c0_i32 = arith.constant 0 : i32
    %c0_i32_0 = arith.constant 0 : i32
    %c0_i32_1 = arith.constant 0 : i32
    return %c0_i32, %c0_i32_0 : i32, i32
  }
  func.func @transform_3(%arg0: i32) -> (i32, i32) {
    %c0_i32 = arith.constant 0 : i32
    %c0_i32_0 = arith.constant 0 : i32
    %c0_i32_1 = arith.constant 0 : i32
    return %c0_i32, %c0_i32_0 : i32, i32
  }
  func.func @transform_4(%arg0: i32) -> (i32, i32) {
    %c0_i32 = arith.constant 0 : i32
    %c0_i32_0 = arith.constant 0 : i32
    %c0_i32_1 = arith.constant 0 : i32
    return %c0_i32, %c0_i32_0 : i32, i32
  }
  func.func @transform_5(%arg0: i32) -> (i32, i32) {
    %c0_i32 = arith.constant 0 : i32
    %c0_i32_0 = arith.constant 0 : i32
    %c0_i32_1 = arith.constant 0 : i32
    return %c0_i32, %c0_i32_0 : i32, i32
  }
  func.func @transform_6(%arg0: i32) -> (i32, i32) {
    %c0_i32 = arith.constant 0 : i32
    %c0_i32_0 = arith.constant 0 : i32
    %c0_i32_1 = arith.constant 0 : i32
    return %c0_i32, %c0_i32_0 : i32, i32
  }
  func.func @transform_7(%arg0: i32) -> (i32, i32) {
    %c0_i32 = arith.constant 0 : i32
    %c0_i32_0 = arith.constant 0 : i32
    %c0_i32_1 = arith.constant 0 : i32
    return %c0_i32, %c0_i32_0 : i32, i32
  }
  func.func @transform_8(%arg0: i32) -> (i32, i32) {
    %c0_i32 = arith.constant 0 : i32
    %c0_i32_0 = arith.constant 0 : i32
    %c0_i32_1 = arith.constant 0 : i32
    return %c0_i32, %c0_i32_0 : i32, i32
  }
}

</mosaic_0001>

<llo_original>
// kernel: tpu_custom_call.1
$region0: #{tpu_custom_call.1}
  #allocation0 [shape = 'u32[]', space=smem, size = 0x4, offset = 0x4, fixed_abs, tag = 'smem constant byte address 0x4 - core index']
  #allocation1 [shape = 'u32[144,128]{1,0:T(1,128)}', space=vmem, size = 0x12000, scoped, tag = 'internal scratch']
  %s0 = inlined_call_operand.vmem [shape: f32[4,512], index: 0, kind: input, shape index: {}]
  %s1 = inlined_call_operand.hbm [shape: f32[36,512], index: 1, kind: input, shape index: {}]
  %s2 = inlined_call_operand.vmem [shape: f32[4,36], index: 2, kind: input, shape index: {}]
  %s3 = inlined_call_operand.vmem [shape: f32[4,1], index: 3, kind: input, shape index: {}]
  %s4 = inlined_call_operand.vmem [shape: f32[4,1], index: 4, kind: input, shape index: {}]
  %s5 = inlined_call_operand.vmem [shape: f32[4,36], index: 5, kind: input, shape index: {}]
  %s6 = inlined_call_operand.vmem [shape: f32[4,1], index: 6, kind: input, shape index: {}]
  %s7 = inlined_call_operand.vmem [shape: f32[4,1], index: 7, kind: input, shape index: {}]
  %s8 = inlined_call_operand.hbm [shape: f32[4,512], index: 8, kind: output, shape index: {}]
  %s9 = sld [smem:[#allocation0]]
  $region46: #{tpu_custom_call.1} parent=0
    _
  %s11 = ssub.s32 1, %s9
  %s12 = scalar_select 0, %s11, %s9
  $region1: #{tpu_custom_call.1} parent=0
    #allocation2 [shape = 'u8[81920]{0}', space=vmem, size = 0x14000, scoped, tag = 'input window, operand 1, single buffered']
    #allocation3 [shape = 's32[1]{0}', space=sflag, size = 0x4, scoped, tag = 'scoped memory for tpu_custom_call.1']
    #allocation4 [shape = 's32[1]{0}', space=sflag, size = 0x4, scoped, tag = 'scoped memory for tpu_custom_call.1']
    #allocation5 [shape = 'u8[8192]{0}', space=vmem, size = 0x2000, scoped, tag = 'output window, operand 0, single buffered']
    %13 = vsyncpa [#allocation3], 0
    %14 = vsyncpa [#allocation4], 0
    // Predicated region
    $region2: #{tpu_custom_call.1} parent=1 // pred_check
      _
    $region3: #{tpu_custom_call.1} parent=1 // pred_check_branch
      %16 = sbr.rel (0) target = $region5
    $region4: #{tpu_custom_call.1} parent=1 // pred_region
      _
    $region5: #{tpu_custom_call.1} parent=1 // pred_fallthru
      _
    // Predicated region
    $region6: #{tpu_custom_call.1} parent=1 // pred_check
      _
    $region7: #{tpu_custom_call.1} parent=1 // pred_check_branch
      %18 = sbr.rel (0) target = $region9
    $region8: #{tpu_custom_call.1} parent=1 // pred_region
      %s20 = ssub.s32 2560, 2560
      %21 = vsyncadd [#allocation3], %s20
      %s22 = sshll.u32 [#allocation2], 4
      %s23 = int_to_ptr.vmem [resolvable:$true] %s22
      %28 = dma.hbm_to_vmem [thread:$0]  %s1, 2560, %s23, [#allocation3], 512, 512, 32
    $region9: #{tpu_custom_call.1} parent=1 // pred_fallthru
      _
    // Predicated region
    $region10: #{tpu_custom_call.1} parent=1 // pred_check
      _
    $region11: #{tpu_custom_call.1} parent=1 // pred_check_branch
      %30 = sbr.rel (0) target = $region13
    $region12: #{tpu_custom_call.1} parent=1 // pred_region
      _
    $region13: #{tpu_custom_call.1} parent=1 // pred_fallthru
      _
    // Predicated region
    $region14: #{tpu_custom_call.1} parent=1 // pred_check
      _
    $region15: #{tpu_custom_call.1} parent=1 // pred_check_branch
      %32 = sbr.rel (0) target = $region17
    $region16: #{tpu_custom_call.1} parent=1 // pred_region
      _
    $region17: #{tpu_custom_call.1} parent=1 // pred_fallthru
      _
    // Predicated region
    $region18: #{tpu_custom_call.1} parent=1 // pred_check
      _
    $region19: #{tpu_custom_call.1} parent=1 // pred_check_branch
      %34 = sbr.rel (0) target = $region21
    $region20: #{tpu_custom_call.1} parent=1 // pred_region
      _
    $region21: #{tpu_custom_call.1} parent=1 // pred_fallthru
      _
    // Predicated region
    $region22: #{tpu_custom_call.1} parent=1 // pred_check
      _
    $region23: #{tpu_custom_call.1} parent=1 // pred_check_branch
      %36 = sbr.rel (0) target = $region25
    $region24: #{tpu_custom_call.1} parent=1 // pred_region
      _
    $region25: #{tpu_custom_call.1} parent=1 // pred_fallthru
      _
    // Predicated region
    $region26: #{tpu_custom_call.1} parent=1 // pred_check
      _
    $region27: #{tpu_custom_call.1} parent=1 // pred_check_branch
      %38 = sbr.rel (0) target = $region29
    $region28: #{tpu_custom_call.1} parent=1 // pred_region
      _
    $region29: #{tpu_custom_call.1} parent=1 // pred_fallthru
      _
    // Predicated region
    $region30: #{tpu_custom_call.1} parent=1 // pred_check
      _
    $region31: #{tpu_custom_call.1} parent=1 // pred_check_branch
      %40 = sbr.rel (0) target = $region33
    $region32: #{tpu_custom_call.1} parent=1 // pred_region
      _
    $region33: #{tpu_custom_call.1} parent=1 // pred_fallthru
      _
    // Predicated region
    $region34: #{tpu_custom_call.1} parent=1 // pred_check
      _
    $region35: #{tpu_custom_call.1} parent=1 // pred_check_branch
      %42 = sbr.rel (0) target = $region37
    $region36: #{tpu_custom_call.1} parent=1 // pred_region
      %43 = dma.done [#allocation3], 2560
    $region37: #{tpu_custom_call.1} parent=1 // pred_fallthru
      _
    %v44 = vld [vmem:[%s0] sm:$0xff]
    %v45 = vld [vmem:[%s0 + $0x8] sm:$0xff]
    %v46 = vld [vmem:[#allocation2] sm:$0xff]
    %v47 = vld [vmem:[#allocation2 + $0x8] sm:$0xff]
    %v48 = vld [vmem:[#allocation2 + $0x10] sm:$0xff]
    %v49 = vld [vmem:[#allocation2 + $0x18] sm:$0xff]
    %v50 = vld [vmem:[#allocation2 + $0x20] sm:$0xff]
    %v51 = vld [vmem:[#allocation2 + $0x28] sm:$0xff]
    %v52 = vld [vmem:[#allocation2 + $0x30] sm:$0xff]
    %v53 = vld [vmem:[#allocation2 + $0x38] sm:$0xff]
    %v54 = vld [vmem:[#allocation2 + $0x40] sm:$0xff]
    %v55 = vld [vmem:[#allocation2 + $0x48] sm:$0xff]
    %v56 = vld [vmem:[#allocation2 + $0x50] sm:$0xff]
    %v57 = vld [vmem:[#allocation2 + $0x58] sm:$0xff]
    %v58 = vld [vmem:[#allocation2 + $0x60] sm:$0xff]
    %v59 = vld [vmem:[#allocation2 + $0x68] sm:$0xff]
    %v60 = vld [vmem:[#allocation2 + $0x70] sm:$0xff]
    %v61 = vld [vmem:[#allocation2 + $0x78] sm:$0xff]
    %v62 = vld [vmem:[#allocation2 + $0x80] sm:$0xf]
    %v63 = vld [vmem:[#allocation2 + $0x88] sm:$0xf]
    %v64 = vld [vmem:[#allocation2 + $0x90] sm:$0xf]
    %v65 = vld [vmem:[#allocation2 + $0x98] sm:$0xf]
    %v66 = vld [vmem:[%s2] sm:$0xf]
    %v69 = vcombine.high %v44, %v44
    %v70 = vcombine.high %v45, %v45
    %73 = vrot.lane.b32.xlu0 %v44, 17
    %v74 = vpop.permute.xlu0 %73
    %75 = vrot.lane.b32.xlu0 %v69, 17
    %v76 = vpop.permute.xlu0 %75
    %77 = vrot.lane.b32.xlu0 %v45, 17
    %v78 = vpop.permute.xlu0 %77
    %79 = vrot.lane.b32.xlu0 %v70, 17
    %v80 = vpop.permute.xlu0 %79
    %v81 = vlaneseq
    %v82 = vand.u32 %v81, 127
    %vm83 = vcmp.lt.s32.totalorder %v82, 17
    %v84 = vsel %vm83, %v78, %v80
    %v85 = vsel %vm83, %v76, %v78
    %v86 = vsel %vm83, %v74, %v76
    %v87 = vsel %vm83, %v80, %v74
    %88 = vrot.lane.b32.xlu0 %v44, 16
    %v89 = vpop.permute.xlu0 %88
    %90 = vrot.lane.b32.xlu0 %v69, 16
    %v91 = vpop.permute.xlu0 %90
    %92 = vrot.lane.b32.xlu0 %v45, 16
    %v93 = vpop.permute.xlu0 %92
    %94 = vrot.lane.b32.xlu0 %v70, 16
    %v95 = vpop.permute.xlu0 %94
    %vm96 = vcmp.lt.s32.totalorder %v82, 16
    %v97 = vsel %vm96, %v93, %v95
    %v98 = vsel %vm96, %v91, %v93
    %v99 = vsel %vm96, %v89, %v91
    %v100 = vsel %vm96, %v95, %v89
    %101 = vrot.lane.b32.xlu0 %v44, 15
    %v102 = vpop.permute.xlu0 %101
    %103 = vrot.lane.b32.xlu0 %v69, 15
    %v104 = vpop.permute.xlu0 %103
    %105 = vrot.lane.b32.xlu0 %v45, 15
    %v106 = vpop.permute.xlu0 %105
    %107 = vrot.lane.b32.xlu0 %v70, 15
    %v108 = vpop.permute.xlu0 %107
    %vm109 = vcmp.lt.s32.totalorder %v82, 15
    %v110 = vsel %vm109, %v106, %v108
    %v111 = vsel %vm109, %v104, %v106
    %v112 = vsel %vm109, %v102, %v104
    %v113 = vsel %vm109, %v108, %v102
    %114 = vrot.lane.b32.xlu0 %v44, 1
    %v115 = vpop.permute.xlu0 %114
    %116 = vrot.lane.b32.xlu0 %v69, 1
    %v117 = vpop.permute.xlu0 %116
    %118 = vrot.lane.b32.xlu0 %v45, 1
    %v119 = vpop.permute.xlu0 %118
    %120 = vrot.lane.b32.xlu0 %v70, 1
    %v121 = vpop.permute.xlu0 %120
    %vm122 = vcmp.lt.s32.totalorder %v82, 1
    %v123 = vsel %vm122, %v119, %v121
    %v124 = vsel %vm122, %v117, %v119
    %v125 = vsel %vm122, %v115, %v117
    %v126 = vsel %vm122, %v121, %v115
    %127 = vrot.lane.b32.xlu0 %v44, 127
    %v128 = vpop.permute.xlu0 %127
    %129 = vrot.lane.b32.xlu0 %v69, 127
    %v130 = vpop.permute.xlu0 %129
    %131 = vrot.lane.b32.xlu0 %v45, 127
    %v132 = vpop.permute.xlu0 %131
    %133 = vrot.lane.b32.xlu0 %v70, 127
    %v134 = vpop.permute.xlu0 %133
    %vm135 = vcmp.lt.s32.totalorder %v82, 127
    %v136 = vsel %vm135, %v132, %v134
    %v137 = vsel %vm135, %v130, %v132
    %v138 = vsel %vm135, %v128, %v130
    %v139 = vsel %vm135, %v134, %v128
    %140 = vrot.lane.b32.xlu0 %v44, 113
    %v141 = vpop.permute.xlu0 %140
    %142 = vrot.lane.b32.xlu0 %v69, 113
    %v143 = vpop.permute.xlu0 %142
    %144 = vrot.lane.b32.xlu0 %v45, 113
    %v145 = vpop.permute.xlu0 %144
    %146 = vrot.lane.b32.xlu0 %v70, 113
    %v147 = vpop.permute.xlu0 %146
    %vm148 = vcmp.lt.s32.totalorder %v82, 113
    %v149 = vsel %vm148, %v145, %v147
    %v150 = vsel %vm148, %v143, %v145
    %v151 = vsel %vm148, %v141, %v143
    %v152 = vsel %vm148, %v147, %v141
    %153 = vrot.lane.b32.xlu0 %v44, 112
    %v154 = vpop.permute.xlu0 %153
    %155 = vrot.lane.b32.xlu0 %v69, 112
    %v156 = vpop.permute.xlu0 %155
    %157 = vrot.lane.b32.xlu0 %v45, 112
    %v158 = vpop.permute.xlu0 %157
    %159 = vrot.lane.b32.xlu0 %v70, 112
    %v160 = vpop.permute.xlu0 %159
    %vm161 = vcmp.lt.s32.totalorder %v82, 112
    %v162 = vsel %vm161, %v158, %v160
    %v163 = vsel %vm161, %v156, %v158
    %v164 = vsel %vm161, %v154, %v156
    %v165 = vsel %vm161, %v160, %v154
    %166 = vrot.lane.b32.xlu0 %v44, 111
    %v167 = vpop.permute.xlu0 %166
    %168 = vrot.lane.b32.xlu0 %v69, 111
    %v169 = vpop.permute.xlu0 %168
    %170 = vrot.lane.b32.xlu0 %v45, 111
    %v171 = vpop.permute.xlu0 %170
    %172 = vrot.lane.b32.xlu0 %v70, 111
    %v173 = vpop.permute.xlu0 %172
    %vm174 = vcmp.lt.s32.totalorder %v82, 111
    %v175 = vsel %vm174, %v171, %v173
    %v176 = vsel %vm174, %v169, %v171
    %v177 = vsel %vm174, %v167, %v169
    %v178 = vsel %vm174, %v173, %v167
    %v183 = vrot.slane %v100, 4
    %v184 = vrot.slane %v99, 4
    %v185 = vrot.slane %v98, 4
    %v186 = vrot.slane %v97, 4
    %v195 = vrot.slane %v126, 4
    %v196 = vrot.slane %v125, 4
    %v197 = vrot.slane %v124, 4
    %v198 = vrot.slane %v123, 4
    %v207 = vrot.slane %v138, 4
    %v208 = vrot.slane %v137, 4
    %v209 = vrot.slane %v136, 4
    %v210 = vrot.slane %v139, 4
    %v219 = vrot.slane %v164, 4
    %v220 = vrot.slane %v163, 4
    %v221 = vrot.slane %v162, 4
    %v222 = vrot.slane %v165, 4
    %vm227 = vcmask 1043456
    %v228 = vsel %vm227, %v87, %v183
    %v229 = vsel %vm227, %v86, %v184
    %v230 = vsel %vm227, %v85, %v185
    %v231 = vsel %vm227, %v84, %v186
    %v232 = vsel %vm227, %v113, %v195
    %v233 = vsel %vm227, %v112, %v196
    %v234 = vsel %vm227, %v111, %v197
    %v235 = vsel %vm227, %v110, %v198
    %v236 = vsel %vm227, %v44, %v207
    %v237 = vsel %vm227, %v69, %v208
    %v238 = vsel %vm227, %v45, %v209
    %v239 = vsel %vm227, %v70, %v210
    %v240 = vsel %vm227, %v151, %v219
    %v241 = vsel %vm227, %v150, %v220
    %v242 = vsel %vm227, %v149, %v221
    %v243 = vsel %vm227, %v152, %v222
    %v244 = vmul.f32 %v228, %v46
    %v245 = vmul.f32 %v229, %v47
    %v246 = vmul.f32 %v230, %v48
    %v247 = vmul.f32 %v231, %v49
    %v248 = vmul.f32 %v232, %v50
    %v249 = vmul.f32 %v233, %v51
    %v250 = vmul.f32 %v234, %v52
    %v251 = vmul.f32 %v235, %v53
    %v252 = vmul.f32 %v236, %v54
    %v253 = vmul.f32 %v237, %v55
    %v254 = vmul.f32 %v238, %v56
    %v255 = vmul.f32 %v239, %v57
    %v256 = vmul.f32 %v240, %v58
    %v257 = vmul.f32 %v241, %v59
    %v258 = vmul.f32 %v242, %v60
    %v259 = vmul.f32 %v243, %v61
    %v260 = vmul.f32 %v177, %v62
    %v261 = vmul.f32 %v176, %v63
    %v262 = vmul.f32 %v175, %v64
    %v263 = vmul.f32 %v178, %v65
    %vm264 = vcmask 293888
    %v266 = vsel %vm264, %v66, 0
    %v269 = vsel %vm227, %v260, 0
    %v272 = vsel %vm227, %v261, 0
    %v275 = vsel %vm227, %v262, 0
    %v278 = vsel %vm227, %v263, 0
    %280 = vmatprep.subr.mxu0 %v245
    %281 = vmatpush1.msra.mxu0 %v244
    %282 = vmatprep.subr.mxu0 %v249
    %283 = vmatpush1.msra.mxu0 %v248
    %284 = vmatprep.subr.mxu0 %v253
    %285 = vmatpush1.msra.mxu0 %v252
    %286 = vmatprep.subr.mxu0 %v257
    %287 = vmatpush1.msra.mxu0 %v256
    %288 = vmatprep.subr.mxu0 %v272
    %289 = vmatpush1.msra.mxu0 %v269
    %290 = vmatprep.subr.mxu0 0.0
    %291 = vmatpush1.msra.mxu0 0.0
    %292 = vmatprep.subr.mxu0 0.0
    %293 = vmatpush1.msra.mxu0 0.0
    %294 = vmatprep.subr.mxu0 0.0
    %295 = vmatpush1.msra.mxu0 0.0
    %296 = vmatprep.subr.mxu0 0.0
    %297 = vmatpush1.msra.mxu0 0.0
    %298 = vmatprep.subr.mxu0 0.0
    %299 = vmatpush1.msra.mxu0 0.0
    %300 = vmatprep.subr.mxu0 0.0
    %301 = vmatpush1.msra.mxu0 0.0
    %302 = vmatprep.subr.mxu0 0.0
    %303 = vmatpush1.msra.mxu0 0.0
    %304 = vmatprep.subr.mxu0 0.0
    %305 = vmatpush1.msra.mxu0 0.0
    %306 = vmatprep.subr.mxu0 0.0
    %307 = vmatpush1.msra.mxu0 0.0
    %308 = vmatprep.subr.mxu0 0.0
    %309 = vmatpush1.msra.mxu0 0.0
    %310 = vmatprep.subr.mxu0 0.0
    %311 = vmatpush1.msra.mxu0 0.0
    %312 = vmatprep.subr.mxu0 0.0
    %313 = vmatpush1.msra.mxu0 0.0
    %314 = vmatprep.subr.mxu0 0.0
    %315 = vmatpush1.msra.mxu0 0.0
    %316 = vmatprep.subr.mxu0 0.0
    %317 = vmatpush1.msra.mxu0 0.0
    %318 = vmatprep.subr.mxu0 0.0
    %319 = vmatpush1.msra.mxu0 0.0
    %320 = vmatprep.subr.mxu0 0.0
    %321 = vmatpush1.msra.mxu0 0.0
    %322 = vmatprep.subr.mxu0 0.0
    %323 = vmatpush1.msra.mxu0 0.0
    %324 = vmatprep.subr.mxu0 0.0
    %325 = vmatpush1.msra.mxu0 0.0
    %326 = vmatprep.subr.mxu0 0.0
    %327 = vmatpush1.msra.mxu0 0.0
    %328 = vmatprep.subr.mxu0 0.0
    %329 = vmatpush1.msra.mxu0 0.0
    %330 = vmatprep.subr.mxu0 0.0
    %331 = vmatpush1.msra.mxu0 0.0
    %332 = vmatprep.subr.mxu0 0.0
    %333 = vmatpush1.msra.mxu0 0.0
    %334 = vmatprep.subr.mxu0 0.0
    %335 = vmatpush1.msra.mxu0 0.0
    %336 = vmatprep.subr.mxu0 0.0
    %337 = vmatpush1.msra.mxu0 0.0
    %338 = vmatprep.subr.mxu0 0.0
    %339 = vmatpush1.msra.mxu0 0.0
    %340 = vmatprep.subr.mxu0 0.0
    %341 = vmatpush1.msra.mxu0 0.0
    %342 = vmatprep.subr.mxu0 0.0
    %343 = vmatpush1.msra.mxu0 0.0
    %344 = vmatprep.mubr.f32.mxu0 0.0
    %345 = vmatmul.mubr.f32.gmra.mrb[0].mxu0 %v266
    %v346 = vpop.f32.mrb[0].mxu0
    %v347 = vadd.f32 0.0, %v346
    %v348 = vpop.f32.mrb[0].mxu0
    %v349 = vadd.f32 0.0, %v348
    %350 = vdwg.mxu0
    %351 = vmatprep.subr.mxu0 %v247
    %352 = vmatpush1.msra.mxu0 %v246
    %353 = vmatprep.subr.mxu0 %v251
    %354 = vmatpush1.msra.mxu0 %v250
    %355 = vmatprep.subr.mxu0 %v255
    %356 = vmatpush1.msra.mxu0 %v254
    %357 = vmatprep.subr.mxu0 %v259
    %358 = vmatpush1.msra.mxu0 %v258
    %359 = vmatprep.subr.mxu0 %v278
    %360 = vmatpush1.msra.mxu0 %v275
    %361 = vmatprep.subr.mxu0 0.0
    %362 = vmatpush1.msra.mxu0 0.0
    %363 = vmatprep.subr.mxu0 0.0
    %364 = vmatpush1.msra.mxu0 0.0
    %365 = vmatprep.subr.mxu0 0.0
    %366 = vmatpush1.msra.mxu0 0.0
    %367 = vmatprep.subr.mxu0 0.0
    %368 = vmatpush1.msra.mxu0 0.0
    %369 = vmatprep.subr.mxu0 0.0
    %370 = vmatpush1.msra.mxu0 0.0
    %371 = vmatprep.subr.mxu0 0.0
    %372 = vmatpush1.msra.mxu0 0.0
    %373 = vmatprep.subr.mxu0 0.0
    %374 = vmatpush1.msra.mxu0 0.0
    %375 = vmatprep.subr.mxu0 0.0
    %376 = vmatpush1.msra.mxu0 0.0
    %377 = vmatprep.subr.mxu0 0.0
    %378 = vmatpush1.msra.mxu0 0.0
    %379 = vmatprep.subr.mxu0 0.0
    %380 = vmatpush1.msra.mxu0 0.0
    %381 = vmatprep.subr.mxu0 0.0
    %382 = vmatpush1.msra.mxu0 0.0
    %383 = vmatprep.subr.mxu0 0.0
    %384 = vmatpush1.msra.mxu0 0.0
    %385 = vmatprep.subr.mxu0 0.0
    %386 = vmatpush1.msra.mxu0 0.0
    %387 = vmatprep.subr.mxu0 0.0
    %388 = vmatpush1.msra.mxu0 0.0
    %389 = vmatprep.subr.mxu0 0.0
    %390 = vmatpush1.msra.mxu0 0.0
    %391 = vmatprep.subr.mxu0 0.0
    %392 = vmatpush1.msra.mxu0 0.0
    %393 = vmatprep.subr.mxu0 0.0
    %394 = vmatpush1.msra.mxu0 0.0
    %395 = vmatprep.subr.mxu0 0.0
    %396 = vmatpush1.msra.mxu0 0.0
    %397 = vmatprep.subr.mxu0 0.0
    %398 = vmatpush1.msra.mxu0 0.0
    %399 = vmatprep.subr.mxu0 0.0
    %400 = vmatpush1.msra.mxu0 0.0
    %401 = vmatprep.subr.mxu0 0.0
    %402 = vmatpush1.msra.mxu0 0.0
    %403 = vmatprep.subr.mxu0 0.0
    %404 = vmatpush1.msra.mxu0 0.0
    %405 = vmatprep.subr.mxu0 0.0
    %406 = vmatpush1.msra.mxu0 0.0
    %407 = vmatprep.subr.mxu0 0.0
    %408 = vmatpush1.msra.mxu0 0.0
    %409 = vmatprep.subr.mxu0 0.0
    %410 = vmatpush1.msra.mxu0 0.0
    %411 = vmatprep.subr.mxu0 0.0
    %412 = vmatpush1.msra.mxu0 0.0
    %413 = vmatprep.subr.mxu0 0.0
    %414 = vmatpush1.msra.mxu0 0.0
    %415 = vmatprep.mubr.f32.mxu0 0.0
    %416 = vmatmul.mubr.f32.gmra.mrb[0].mxu0 %v266
    %v417 = vpop.f32.mrb[0].mxu0
    %v418 = vadd.f32 0.0, %v417
    %v419 = vpop.f32.mrb[0].mxu0
    %v420 = vadd.f32 0.0, %v419
    %421 = vdwg.mxu0
    %v422 = vld [vmem:[%s3] sm:$0xf]
    %v423 = vld [vmem:[%s4] sm:$0xf]
    %v424 = vsel %vm227, %v347, 0.0
    %v425 = vsel %vm227, %v349, 0.0
    %v426 = vadd.f32 %v424, %v425
    %v427 = vsel %vm227, %v418, 0.0
    %v428 = vadd.f32 %v426, %v427
    %v429 = vsel %vm227, %v420, 0.0
    %v430 = vadd.f32 %v428, %v429
    %431 = vadd.xlane.f32.xlu0 %v430
    %v432 = vpop.xlane.xlu0 %431
    %v433 = vmul.f32 %v432, 0.001953125
    %v434 = vsub.f32 %v347, %v433
    %v435 = vsub.f32 %v349, %v433
    %v436 = vsub.f32 %v418, %v433
    %v437 = vsub.f32 %v420, %v433
    %v438 = vmul.f32 %v434, %v434
    %v439 = vmul.f32 %v435, %v435
    %v440 = vmul.f32 %v436, %v436
    %v441 = vmul.f32 %v437, %v437
    %v442 = vsel %vm227, %v438, 0.0
    %v443 = vsel %vm227, %v439, 0.0
    %v444 = vadd.f32 %v442, %v443
    %v445 = vsel %vm227, %v440, 0.0
    %v446 = vadd.f32 %v444, %v445
    %v447 = vsel %vm227, %v441, 0.0
    %v448 = vadd.f32 %v446, %v447
    %449 = vadd.xlane.f32.xlu0 %v448
    %v450 = vpop.xlane.xlu0 %449
    %v451 = vmul.f32 %v450, 0.001953125
    %v452 = vadd.f32 %v451, 1e-05
    %v453 = vrsqrt.pop %v452
    %v454 = vmul.f32 %v422, %v453
    %456 = vset.pattern.permute.xlu0 0
    %457 = vperm.xlu0 %456, %v454
    %v458 = vpop.permute.xlu0 %457
    %v460 = vmul.f32 %v434, %v458
    %v461 = vmul.f32 %v435, %v458
    %v462 = vmul.f32 %v436, %v458
    %v463 = vmul.f32 %v437, %v458
    %465 = vset.pattern.permute.xlu0 0
    %466 = vperm.xlu0 %465, %v423
    %v467 = vpop.permute.xlu0 %466
    %v469 = vadd.f32 %v460, %v467
    %v470 = vadd.f32 %v461, %v467
    %v471 = vadd.f32 %v462, %v467
    %v472 = vadd.f32 %v463, %v467
    %v473 = vmax.f32 %v469, 0.0
    %v474 = vmax.f32 %v470, 0.0
    %v475 = vmax.f32 %v471, 0.0
    %v476 = vmax.f32 %v472, 0.0
    %v477 = vld [vmem:[%s5] sm:$0xf]
    %478 = vrot.lane.b32.xlu0 %v473, 17
    %v479 = vpop.permute.xlu0 %478
    %480 = vrot.lane.b32.xlu0 %v474, 17
    %v481 = vpop.permute.xlu0 %480
    %482 = vrot.lane.b32.xlu0 %v475, 17
    %v483 = vpop.permute.xlu0 %482
    %484 = vrot.lane.b32.xlu0 %v476, 17
    %v485 = vpop.permute.xlu0 %484
    %v486 = vsel %vm83, %v483, %v485
    %v487 = vsel %vm83, %v481, %v483
    %v488 = vsel %vm83, %v479, %v481
    %v489 = vsel %vm83, %v485, %v479
    %490 = vrot.lane.b32.xlu0 %v473, 16
    %v491 = vpop.permute.xlu0 %490
    %492 = vrot.lane.b32.xlu0 %v474, 16
    %v493 = vpop.permute.xlu0 %492
    %494 = vrot.lane.b32.xlu0 %v475, 16
    %v495 = vpop.permute.xlu0 %494
    %496 = vrot.lane.b32.xlu0 %v476, 16
    %v497 = vpop.permute.xlu0 %496
    %v498 = vsel %vm96, %v495, %v497
    %v499 = vsel %vm96, %v493, %v495
    %v500 = vsel %vm96, %v491, %v493
    %v501 = vsel %vm96, %v497, %v491
    %502 = vrot.lane.b32.xlu0 %v473, 15
    %v503 = vpop.permute.xlu0 %502
    %504 = vrot.lane.b32.xlu0 %v474, 15
    %v505 = vpop.permute.xlu0 %504
    %506 = vrot.lane.b32.xlu0 %v475, 15
    %v507 = vpop.permute.xlu0 %506
    %508 = vrot.lane.b32.xlu0 %v476, 15
    %v509 = vpop.permute.xlu0 %508
    %v510 = vsel %vm109, %v507, %v509
    %v511 = vsel %vm109, %v505, %v507
    %v512 = vsel %vm109, %v503, %v505
    %v513 = vsel %vm109, %v509, %v503
    %514 = vrot.lane.b32.xlu0 %v473, 1
    %v515 = vpop.permute.xlu0 %514
    %516 = vrot.lane.b32.xlu0 %v474, 1
    %v517 = vpop.permute.xlu0 %516
    %518 = vrot.lane.b32.xlu0 %v475, 1
    %v519 = vpop.permute.xlu0 %518
    %520 = vrot.lane.b32.xlu0 %v476, 1
    %v521 = vpop.permute.xlu0 %520
    %v522 = vsel %vm122, %v519, %v521
    %v523 = vsel %vm122, %v517, %v519
    %v524 = vsel %vm122, %v515, %v517
    %v525 = vsel %vm122, %v521, %v515
    %526 = vrot.lane.b32.xlu0 %v473, 127
    %v527 = vpop.permute.xlu0 %526
    %528 = vrot.lane.b32.xlu0 %v474, 127
    %v529 = vpop.permute.xlu0 %528
    %530 = vrot.lane.b32.xlu0 %v475, 127
    %v531 = vpop.permute.xlu0 %530
    %532 = vrot.lane.b32.xlu0 %v476, 127
    %v533 = vpop.permute.xlu0 %532
    %v534 = vsel %vm135, %v531, %v533
    %v535 = vsel %vm135, %v529, %v531
    %v536 = vsel %vm135, %v527, %v529
    %v537 = vsel %vm135, %v533, %v527
    %538 = vrot.lane.b32.xlu0 %v473, 113
    %v539 = vpop.permute.xlu0 %538
    %540 = vrot.lane.b32.xlu0 %v474, 113
    %v541 = vpop.permute.xlu0 %540
    %542 = vrot.lane.b32.xlu0 %v475, 113
    %v543 = vpop.permute.xlu0 %542
    %544 = vrot.lane.b32.xlu0 %v476, 113
    %v545 = vpop.permute.xlu0 %544
    %v546 = vsel %vm148, %v543, %v545
    %v547 = vsel %vm148, %v541, %v543
    %v548 = vsel %vm148, %v539, %v541
    %v549 = vsel %vm148, %v545, %v539
    %550 = vrot.lane.b32.xlu0 %v473, 112
    %v551 = vpop.permute.xlu0 %550
    %552 = vrot.lane.b32.xlu0 %v474, 112
    %v553 = vpop.permute.xlu0 %552
    %554 = vrot.lane.b32.xlu0 %v475, 112
    %v555 = vpop.permute.xlu0 %554
    %556 = vrot.lane.b32.xlu0 %v476, 112
    %v557 = vpop.permute.xlu0 %556
    %v558 = vsel %vm161, %v555, %v557
    %v559 = vsel %vm161, %v553, %v555
    %v560 = vsel %vm161, %v551, %v553
    %v561 = vsel %vm161, %v557, %v551
    %562 = vrot.lane.b32.xlu0 %v473, 111
    %v563 = vpop.permute.xlu0 %562
    %564 = vrot.lane.b32.xlu0 %v474, 111
    %v565 = vpop.permute.xlu0 %564
    %566 = vrot.lane.b32.xlu0 %v475, 111
    %v567 = vpop.permute.xlu0 %566
    %568 = vrot.lane.b32.xlu0 %v476, 111
    %v569 = vpop.permute.xlu0 %568
    %v570 = vsel %vm174, %v567, %v569
    %v571 = vsel %vm174, %v565, %v567
    %v572 = vsel %vm174, %v563, %v565
    %v573 = vsel %vm174, %v569, %v563
    %v578 = vrot.slane %v501, 4
    %v579 = vrot.slane %v500, 4
    %v580 = vrot.slane %v499, 4
    %v581 = vrot.slane %v498, 4
    %v590 = vrot.slane %v525, 4
    %v591 = vrot.slane %v524, 4
    %v592 = vrot.slane %v523, 4
    %v593 = vrot.slane %v522, 4
    %v602 = vrot.slane %v536, 4
    %v603 = vrot.slane %v535, 4
    %v604 = vrot.slane %v534, 4
    %v605 = vrot.slane %v537, 4
    %v614 = vrot.slane %v560, 4
    %v615 = vrot.slane %v559, 4
    %v616 = vrot.slane %v558, 4
    %v617 = vrot.slane %v561, 4
    %v622 = vsel %vm227, %v489, %v578
    %v623 = vsel %vm227, %v488, %v579
    %v624 = vsel %vm227, %v487, %v580
    %v625 = vsel %vm227, %v486, %v581
    %v626 = vsel %vm227, %v513, %v590
    %v627 = vsel %vm227, %v512, %v591
    %v628 = vsel %vm227, %v511, %v592
    %v629 = vsel %vm227, %v510, %v593
    %v630 = vsel %vm227, %v473, %v602
    %v631 = vsel %vm227, %v474, %v603
    %v632 = vsel %vm227, %v475, %v604
    %v633 = vsel %vm227, %v476, %v605
    %v634 = vsel %vm227, %v548, %v614
    %v635 = vsel %vm227, %v547, %v615
    %v636 = vsel %vm227, %v546, %v616
    %v637 = vsel %vm227, %v549, %v617
    %v638 = vmul.f32 %v622, %v46
    %v639 = vmul.f32 %v623, %v47
    %v640 = vmul.f32 %v624, %v48
    %v641 = vmul.f32 %v625, %v49
    %v642 = vmul.f32 %v626, %v50
    %v643 = vmul.f32 %v627, %v51
    %v644 = vmul.f32 %v628, %v52
    %v645 = vmul.f32 %v629, %v53
    %v646 = vmul.f32 %v630, %v54
    %v647 = vmul.f32 %v631, %v55
    %v648 = vmul.f32 %v632, %v56
    %v649 = vmul.f32 %v633, %v57
    %v650 = vmul.f32 %v634, %v58
    %v651 = vmul.f32 %v635, %v59
    %v652 = vmul.f32 %v636, %v60
    %v653 = vmul.f32 %v637, %v61
    %v654 = vmul.f32 %v572, %v62
    %v655 = vmul.f32 %v571, %v63
    %v656 = vmul.f32 %v570, %v64
    %v657 = vmul.f32 %v573, %v65
    %v659 = vsel %vm264, %v477, 0
    %v662 = vsel %vm227, %v654, 0
    %v665 = vsel %vm227, %v655, 0
    %v668 = vsel %vm227, %v656, 0
    %v671 = vsel %vm227, %v657, 0
    %673 = vmatprep.subr.mxu0 %v639
    %674 = vmatpush1.msra.mxu0 %v638
    %675 = vmatprep.subr.mxu0 %v643
    %676 = vmatpush1.msra.mxu0 %v642
    %677 = vmatprep.subr.mxu0 %v647
    %678 = vmatpush1.msra.mxu0 %v646
    %679 = vmatprep.subr.mxu0 %v651
    %680 = vmatpush1.msra.mxu0 %v650
    %681 = vmatprep.subr.mxu0 %v665
    %682 = vmatpush1.msra.mxu0 %v662
    %683 = vmatprep.subr.mxu0 0.0
    %684 = vmatpush1.msra.mxu0 0.0
    %685 = vmatprep.subr.mxu0 0.0
    %686 = vmatpush1.msra.mxu0 0.0
    %687 = vmatprep.subr.mxu0 0.0
    %688 = vmatpush1.msra.mxu0 0.0
    %689 = vmatprep.subr.mxu0 0.0
    %690 = vmatpush1.msra.mxu0 0.0
    %691 = vmatprep.subr.mxu0 0.0
    %692 = vmatpush1.msra.mxu0 0.0
    %693 = vmatprep.subr.mxu0 0.0
    %694 = vmatpush1.msra.mxu0 0.0
    %695 = vmatprep.subr.mxu0 0.0
    %696 = vmatpush1.msra.mxu0 0.0
    %697 = vmatprep.subr.mxu0 0.0
    %698 = vmatpush1.msra.mxu0 0.0
    %699 = vmatprep.subr.mxu0 0.0
    %700 = vmatpush1.msra.mxu0 0.0
    %701 = vmatprep.subr.mxu0 0.0
    %702 = vmatpush1.msra.mxu0 0.0
    %703 = vmatprep.subr.mxu0 0.0
    %704 = vmatpush1.msra.mxu0 0.0
    %705 = vmatprep.subr.mxu0 0.0
    %706 = vmatpush1.msra.mxu0 0.0
    %707 = vmatprep.subr.mxu0 0.0
    %708 = vmatpush1.msra.mxu0 0.0
    %709 = vmatprep.subr.mxu0 0.0
    %710 = vmatpush1.msra.mxu0 0.0
    %711 = vmatprep.subr.mxu0 0.0
    %712 = vmatpush1.msra.mxu0 0.0
    %713 = vmatprep.subr.mxu0 0.0
    %714 = vmatpush1.msra.mxu0 0.0
    %715 = vmatprep.subr.mxu0 0.0
    %716 = vmatpush1.msra.mxu0 0.0
    %717 = vmatprep.subr.mxu0 0.0
    %718 = vmatpush1.msra.mxu0 0.0
    %719 = vmatprep.subr.mxu0 0.0
    %720 = vmatpush1.msra.mxu0 0.0
    %721 = vmatprep.subr.mxu0 0.0
    %722 = vmatpush1.msra.mxu0 0.0
    %723 = vmatprep.subr.mxu0 0.0
    %724 = vmatpush1.msra.mxu0 0.0
    %725 = vmatprep.subr.mxu0 0.0
    %726 = vmatpush1.msra.mxu0 0.0
    %727 = vmatprep.subr.mxu0 0.0
    %728 = vmatpush1.msra.mxu0 0.0
    %729 = vmatprep.subr.mxu0 0.0
    %730 = vmatpush1.msra.mxu0 0.0
    %731 = vmatprep.subr.mxu0 0.0
    %732 = vmatpush1.msra.mxu0 0.0
    %733 = vmatprep.subr.mxu0 0.0
    %734 = vmatpush1.msra.mxu0 0.0
    %735 = vmatprep.subr.mxu0 0.0
    %736 = vmatpush1.msra.mxu0 0.0
    %737 = vmatprep.mubr.f32.mxu0 0.0
    %738 = vmatmul.mubr.f32.gmra.mrb[0].mxu0 %v659
    %v739 = vpop.f32.mrb[0].mxu0
    %v740 = vadd.f32 0.0, %v739
    %v741 = vpop.f32.mrb[0].mxu0
    %v742 = vadd.f32 0.0, %v741
    %743 = vdwg.mxu0
    %744 = vmatprep.subr.mxu0 %v641
    %745 = vmatpush1.msra.mxu0 %v640
    %746 = vmatprep.subr.mxu0 %v645
    %747 = vmatpush1.msra.mxu0 %v644
    %748 = vmatprep.subr.mxu0 %v649
    %749 = vmatpush1.msra.mxu0 %v648
    %750 = vmatprep.subr.mxu0 %v653
    %751 = vmatpush1.msra.mxu0 %v652
    %752 = vmatprep.subr.mxu0 %v671
    %753 = vmatpush1.msra.mxu0 %v668
    %754 = vmatprep.subr.mxu0 0.0
    %755 = vmatpush1.msra.mxu0 0.0
    %756 = vmatprep.subr.mxu0 0.0
    %757 = vmatpush1.msra.mxu0 0.0
    %758 = vmatprep.subr.mxu0 0.0
    %759 = vmatpush1.msra.mxu0 0.0
    %760 = vmatprep.subr.mxu0 0.0
    %761 = vmatpush1.msra.mxu0 0.0
    %762 = vmatprep.subr.mxu0 0.0
    %763 = vmatpush1.msra.mxu0 0.0
    %764 = vmatprep.subr.mxu0 0.0
    %765 = vmatpush1.msra.mxu0 0.0
    %766 = vmatprep.subr.mxu0 0.0
    %767 = vmatpush1.msra.mxu0 0.0
    %768 = vmatprep.subr.mxu0 0.0
    %769 = vmatpush1.msra.mxu0 0.0
    %770 = vmatprep.subr.mxu0 0.0
    %771 = vmatpush1.msra.mxu0 0.0
    %772 = vmatprep.subr.mxu0 0.0
    %773 = vmatpush1.msra.mxu0 0.0
    %774 = vmatprep.subr.mxu0 0.0
    %775 = vmatpush1.msra.mxu0 0.0
    %776 = vmatprep.subr.mxu0 0.0
    %777 = vmatpush1.msra.mxu0 0.0
    %778 = vmatprep.subr.mxu0 0.0
    %779 = vmatpush1.msra.mxu0 0.0
    %780 = vmatprep.subr.mxu0 0.0
    %781 = vmatpush1.msra.mxu0 0.0
    %782 = vmatprep.subr.mxu0 0.0
    %783 = vmatpush1.msra.mxu0 0.0
    %784 = vmatprep.subr.mxu0 0.0
    %785 = vmatpush1.msra.mxu0 0.0
    %786 = vmatprep.subr.mxu0 0.0
    %787 = vmatpush1.msra.mxu0 0.0
    %788 = vmatprep.subr.mxu0 0.0
    %789 = vmatpush1.msra.mxu0 0.0
    %790 = vmatprep.subr.mxu0 0.0
    %791 = vmatpush1.msra.mxu0 0.0
    %792 = vmatprep.subr.mxu0 0.0
    %793 = vmatpush1.msra.mxu0 0.0
    %794 = vmatprep.subr.mxu0 0.0
    %795 = vmatpush1.msra.mxu0 0.0
    %796 = vmatprep.subr.mxu0 0.0
    %797 = vmatpush1.msra.mxu0 0.0
    %798 = vmatprep.subr.mxu0 0.0
    %799 = vmatpush1.msra.mxu0 0.0
    %800 = vmatprep.subr.mxu0 0.0
    %801 = vmatpush1.msra.mxu0 0.0
    %802 = vmatprep.subr.mxu0 0.0
    %803 = vmatpush1.msra.mxu0 0.0
    %804 = vmatprep.subr.mxu0 0.0
    %805 = vmatpush1.msra.mxu0 0.0
    %806 = vmatprep.subr.mxu0 0.0
    %807 = vmatpush1.msra.mxu0 0.0
    %808 = vmatprep.mubr.f32.mxu0 0.0
    %809 = vmatmul.mubr.f32.gmra.mrb[0].mxu0 %v659
    %v810 = vpop.f32.mrb[0].mxu0
    %v811 = vadd.f32 0.0, %v810
    %v812 = vpop.f32.mrb[0].mxu0
    %v813 = vadd.f32 0.0, %v812
    %814 = vdwg.mxu0
    %v815 = vld [vmem:[%s6] sm:$0xf]
    %v816 = vld [vmem:[%s7] sm:$0xf]
    %v817 = vsel %vm227, %v740, 0.0
    %v818 = vsel %vm227, %v742, 0.0
    %v819 = vadd.f32 %v817, %v818
    %v820 = vsel %vm227, %v811, 0.0
    %v821 = vadd.f32 %v819, %v820
    %v822 = vsel %vm227, %v813, 0.0
    %v823 = vadd.f32 %v821, %v822
    %824 = vadd.xlane.f32.xlu0 %v823
    %v825 = vpop.xlane.xlu0 %824
    %v826 = vmul.f32 %v825, 0.001953125
    %v827 = vsub.f32 %v740, %v826
    %v828 = vsub.f32 %v742, %v826
    %v829 = vsub.f32 %v811, %v826
    %v830 = vsub.f32 %v813, %v826
    %v831 = vmul.f32 %v827, %v827
    %v832 = vmul.f32 %v828, %v828
    %v833 = vmul.f32 %v829, %v829
    %v834 = vmul.f32 %v830, %v830
    %v835 = vsel %vm227, %v831, 0.0
    %v836 = vsel %vm227, %v832, 0.0
    %v837 = vadd.f32 %v835, %v836
    %v838 = vsel %vm227, %v833, 0.0
    %v839 = vadd.f32 %v837, %v838
    %v840 = vsel %vm227, %v834, 0.0
    %v841 = vadd.f32 %v839, %v840
    %842 = vadd.xlane.f32.xlu0 %v841
    %v843 = vpop.xlane.xlu0 %842
    %v844 = vmul.f32 %v843, 0.001953125
    %v845 = vadd.f32 %v844, 1e-05
    %v846 = vrsqrt.pop %v845
    %v847 = vmul.f32 %v815, %v846
    %849 = vset.pattern.permute.xlu0 0
    %850 = vperm.xlu0 %849, %v847
    %v851 = vpop.permute.xlu0 %850
    %v853 = vmul.f32 %v827, %v851
    %v854 = vmul.f32 %v828, %v851
    %v855 = vmul.f32 %v829, %v851
    %v856 = vmul.f32 %v830, %v851
    %858 = vset.pattern.permute.xlu0 0
    %859 = vperm.xlu0 %858, %v816
    %v860 = vpop.permute.xlu0 %859
    %v862 = vadd.f32 %v853, %v860
    %v863 = vadd.f32 %v854, %v860
    %v864 = vadd.f32 %v855, %v860
    %v865 = vadd.f32 %v856, %v860
    %v866 = vadd.f32 %v862, %v44
    %v867 = vadd.f32 %v863, %v69
    %v868 = vadd.f32 %v864, %v45
    %v869 = vadd.f32 %v865, %v70
    %v870 = vmax.f32 %v866, 0.0
    %v871 = vmax.f32 %v867, 0.0
    %v872 = vmax.f32 %v868, 0.0
    %v873 = vmax.f32 %v869, 0.0
    %v878 = vcombine.low %v870, %v871
    %v879 = vcombine.low %v872, %v873
    %882 = vst [vmem:[#allocation5] sm:$0xff] %v878
    %883 = vst [vmem:[#allocation5 + $0x8] sm:$0xff] %v879
    // Predicated region
    $region38: #{tpu_custom_call.1} parent=1 // pred_check
      _
    $region39: #{tpu_custom_call.1} parent=1 // pred_check_branch
      %885 = sbr.rel (0) target = $region41
    $region40: #{tpu_custom_call.1} parent=1 // pred_region
      %s887 = ssub.s32 256, 256
      %888 = vsyncadd [#allocation4], %s887
      %s890 = sshll.u32 [#allocation5], 4
      %s891 = int_to_ptr.vmem [resolvable:$true] %s890
      %893 = dma.vmem_to_hbm [thread:$0]  %s891, 256, %s8, [#allocation4]
    $region41: #{tpu_custom_call.1} parent=1 // pred_fallthru
      _
    // Predicated region
    $region42: #{tpu_custom_call.1} parent=1 // pred_check
      _
    $region43: #{tpu_custom_call.1} parent=1 // pred_check_branch
      %895 = sbr.rel (0) target = $region45
    $region44: #{tpu_custom_call.1} parent=1 // pred_region
      %896 = dma.done [#allocation4], 256
    $region45: #{tpu_custom_call.1} parent=1 // pred_fallthru
      _
    %897 = vsyncpa [#allocation3], 1
    %898 = vsyncpa [#allocation4], 1

</llo_original>
